<compile_context>
chip_gen: v7x
topology: tpu7x:2x2x1
jax: 0.10.0
libtpu: 0.0.40
codegen_flags: <defaults>
</compile_context>

<pallas_src>
import functools

import jax
import jax.numpy as jnp
from jax.experimental import pallas as pl
from jax.experimental.pallas import tpu as pltpu

INPUT_DIM = 18   # len(min_max_dict)
H1 = 64
H2 = 32
N_HEADS = 2      # row 0 = tipo (tanh), row 1 = profit (identity)


def _round_up(n, m):
    return ((n + m - 1) // m) * m


def _mlp_dual_kernel(x_ref, w1_ref, w2_ref, wh_ref, b_ref, out_ref, *,
                     chunk, n_chunks):
    # x_ref: (tile, 18) natural layout (contiguous HBM tile).
    # out_ref: (2, tile) lane-dense fused-head output.
    # b_ref: (98, 1) f32 = [b1 (64) | b2 (32) | b_tipo (1) | b_profit (1)].
    @pl.loop(0, n_chunks)
    def _(c):
        start = pl.multiple_of(c * chunk, chunk)
        x_c = x_ref[pl.ds(start, chunk), :]                       # (chunk, 18)

        # shared[0]: Linear(18, 64) + ReLU.  NT dot folds the batch->lanes
        # transpose into the MXU op: (64,18) . (chunk,18)^T -> (64, chunk).
        h1 = jax.lax.dot_general(
            w1_ref[...], x_c, (((1,), (1,)), ((), ())),
            preferred_element_type=jnp.float32)
        h1 = jnp.maximum(h1 + b_ref[0:H1, :], 0.0)                # (64, chunk)

        # shared[2]: Linear(64, 32) + ReLU
        h2 = jnp.dot(w2_ref[...], h1.astype(w2_ref.dtype),
                     preferred_element_type=jnp.float32)
        h2 = jnp.maximum(h2 + b_ref[H1:H1 + H2, :], 0.0)          # (32, chunk)

        # Fused heads: one (2,32) x (32,chunk) matmul, one lane-dense store.
        heads = jnp.dot(wh_ref[...], h2.astype(wh_ref.dtype),
                        preferred_element_type=jnp.float32)
        heads = heads + b_ref[H1 + H2:H1 + H2 + N_HEADS, :]       # (2, chunk)
        row = jax.lax.broadcasted_iota(jnp.int32, heads.shape, 0)
        out = jnp.where(row == 0, jnp.tanh(heads), heads)
        out_ref[:, pl.ds(start, chunk)] = out.astype(out_ref.dtype)


@functools.partial(jax.jit, static_argnames=("tile_b", "chunk"))
def trading_model_dual_forward(x, params, *, tile_b=8192, chunk=512):
    """x: (B, 18) float32 or bfloat16.  Returns (tipo, profit), each (B, 1) f32."""
    B, D = x.shape
    assert D == INPUT_DIM
    assert chunk % 128 == 0 and tile_b % chunk == 0

    # Batch tile: as large as tile_b (amortizes the ~0.35us per-grid-step cost),
    # shrunk for small batches; always a multiple of the inner chunk.
    tile = min(tile_b, _round_up(B, 128))
    if tile > chunk:
        tile = _round_up(tile, chunk)
    c = min(chunk, tile)
    n_chunks = tile // c
    grid = (pl.cdiv(B, tile),)          # >= 2 steps whenever B > tile (megacore)
    b_out = grid[0] * tile              # last x block may be ragged; its garbage
                                        # lanes are computed and sliced off below.

    cdt = x.dtype                       # pass bf16 x for the bandwidth-bound path
    w1 = params["w1"].astype(cdt)                                      # (64, 18)
    w2 = params["w2"].astype(cdt)                                      # (32, 64)
    wh = jnp.concatenate([params["wt"], params["wp"]], axis=0).astype(cdt)  # (2, 32)
    b_pack = jnp.concatenate(
        [params["b1"], params["b2"], params["bt"], params["bp"]]
    )[:, None].astype(jnp.float32)                                     # (98, 1)

    def const_spec(shape):
        # Full-array constant block; index map never changes so it is DMA'd once.
        return pl.BlockSpec(shape, lambda i: (0, 0))

    kernel = functools.partial(_mlp_dual_kernel, chunk=c, n_chunks=n_chunks)
    out = pl.pallas_call(
        kernel,
        out_shape=jax.ShapeDtypeStruct((N_HEADS, b_out), jnp.float32),
        grid_spec=pltpu.PrefetchScalarGridSpec(
            num_scalar_prefetch=0,
            grid=grid,
            in_specs=[
                pl.BlockSpec((tile, D), lambda i: (i, 0)),  # x: contiguous HBM tile
                const_spec((H1, D)),                        # W1
                const_spec((H2, H1)),                       # W2
                const_spec((N_HEADS, H2)),                  # fused head weights
                const_spec((H1 + H2 + N_HEADS, 1)),         # packed f32 biases
            ],
            out_specs=pl.BlockSpec((N_HEADS, tile), lambda i: (0, i)),
        ),
        compiler_params=pltpu.CompilerParams(
            dimension_semantics=("parallel",),
            vmem_limit_bytes=32 * 1024 * 1024,   # safe on v5e/v6e and v7x (64 MiB)
        ),
    )(x, w1, w2, wh, b_pack)

    tipo = out[0, :B].reshape(B, 1)
    profit = out[1, :B].reshape(B, 1)
    return tipo, profit


def init_params(key):
    """Deterministic synthetic init, PyTorch-Linear-style layout and bounds:
    weights (out_features, in_features), biases (out_features,)."""
    def linear(key, fan_in, fan_out):
        kw, kb = jax.random.split(key)
        bound = 1.0 / jnp.sqrt(fan_in)
        w = jax.random.uniform(kw, (fan_out, fan_in), jnp.float32, -bound, bound)
        b = jax.random.uniform(kb, (fan_out,), jnp.float32, -bound, bound)
        return w, b

    k1, k2, k3, k4 = jax.random.split(key, 4)
    w1, b1 = linear(k1, INPUT_DIM, H1)
    w2, b2 = linear(k2, H1, H2)
    wt, bt = linear(k3, H2, 1)
    wp, bp = linear(k4, H2, 1)
    return dict(w1=w1, b1=b1, w2=w2, b2=b2, wt=wt, bt=bt, wp=wp, bp=bp)


def reference_forward(x, p):
    x = x.astype(jnp.float32)
    h1 = jnp.maximum(x @ p["w1"].T + p["b1"], 0.0)
    h2 = jnp.maximum(h1 @ p["w2"].T + p["b2"], 0.0)
    tipo = jnp.tanh(h2 @ p["wt"].T + p["bt"])
    profit = h2 @ p["wp"].T + p["bp"]
    return tipo, profit


if __name__ == "__main__":
    key = jax.random.PRNGKey(0)
    kx, kp = jax.random.split(key)
    params = init_params(kp)

    # 1) Small deterministic batch: single 128-lane step, single chunk.
    B = 8
    x = jax.random.uniform(kx, (B, INPUT_DIM), jnp.float32)
    tipo, profit = trading_model_dual_forward(x, params)
    jax.block_until_ready((tipo, profit))
    tipo_ref, profit_ref = reference_forward(x, params)
    assert tipo.shape == (B, 1) and profit.shape == (B, 1)
    assert jnp.allclose(tipo, tipo_ref, atol=1e-4), "tipo mismatch vs reference"
    assert jnp.allclose(profit, profit_ref, atol=1e-4), "profit mismatch vs reference"

    # 2) Multi-step grid + inner chunk loop + ragged last x block (no host pad).
    B2 = 700
    x2 = jax.random.uniform(kx, (B2, INPUT_DIM), jnp.float32)
    tipo2, profit2 = trading_model_dual_forward(x2, params, tile_b=512, chunk=256)
    jax.block_until_ready((tipo2, profit2))
    tipo2_ref, profit2_ref = reference_forward(x2, params)
    assert jnp.allclose(tipo2, tipo2_ref, atol=1e-4), "tipo mismatch (tiled path)"
    assert jnp.allclose(profit2, profit2_ref, atol=1e-4), "profit mismatch (tiled path)"

    # 3) bf16 input path (halves x HBM traffic; f32 accumulation + f32 biases).
    x3 = x2.astype(jnp.bfloat16)
    tipo3, profit3 = trading_model_dual_forward(x3, params)
    jax.block_until_ready((tipo3, profit3))
    assert jnp.allclose(tipo3, tipo2_ref, atol=5e-2), "tipo mismatch (bf16 path)"
    assert jnp.allclose(profit3, profit2_ref, atol=5e-2), "profit mismatch (bf16 path)"

    print("KERNEL_OK")
</pallas_src>

<mosaic_0001>
module attributes {stable_mosaic.version = 11 : i64} {
  func.func @_mlp_dual_kernel(%arg0: i32, %arg1: memref<128x18xf32, #tpu.memory_space<vmem>>, %arg2: memref<64x18xf32, #tpu.memory_space<vmem>>, %arg3: memref<32x64xf32, #tpu.memory_space<vmem>>, %arg4: memref<2x32xf32, #tpu.memory_space<vmem>>, %arg5: memref<98x1xf32, #tpu.memory_space<vmem>>, %arg6: memref<2x128xf32, #tpu.memory_space<vmem>>) attributes {dimension_semantics = [#tpu.dimension_semantics<parallel>], iteration_bounds = array<i64: 1>, scalar_prefetch = 0 : i64, scratch_operands = 0 : i64, tpu.core_type = #tpu.core_type<tc>, window_params = [{transform_indices = @transform_0, window_bounds = array<i64: 128, 18>}, {pipeline_mode = #tpu.pipeline_mode<synchronous>, transform_indices = @transform_1, window_bounds = array<i64: 64, 18>}, {pipeline_mode = #tpu.pipeline_mode<synchronous>, transform_indices = @transform_2, window_bounds = array<i64: 32, 64>}, {pipeline_mode = #tpu.pipeline_mode<synchronous>, transform_indices = @transform_3, window_bounds = array<i64: 2, 32>}, {pipeline_mode = #tpu.pipeline_mode<synchronous>, transform_indices = @transform_4, window_bounds = array<i64: 98, 1>}, {transform_indices = @transform_5, window_bounds = array<i64: 2, 128>}]} {
    %c0_i32 = arith.constant 0 : i32
    %c1_i32 = arith.constant 1 : i32
    %0 = arith.muli %c0_i32, %c1_i32 : i32
    %c0_i32_0 = arith.constant 0 : i32
    %1 = arith.addi %c0_i32_0, %0 : i32
    %c128_i32 = arith.constant 128 : i32
    %2 = arith.muli %1, %c128_i32 : i32
    %3 = tpu.assume_multiple %2, 128 : i32
    %4 = arith.index_cast %3 : i32 to index
    %c0 = arith.constant 0 : index
    %5 = vector.load %arg1[%4, %c0] : memref<128x18xf32, #tpu.memory_space<vmem>>, vector<128x18xf32>
    %c0_1 = arith.constant 0 : index
    %c0_2 = arith.constant 0 : index
    %6 = vector.load %arg2[%c0_1, %c0_2] : memref<64x18xf32, #tpu.memory_space<vmem>>, vector<64x18xf32>
    %cst = arith.constant dense<0.000000e+00> : vector<64x128xf32>
    %7 = tpu.matmul %6, %5, %cst {dimension_numbers = #tpu.dot_dimension_numbers<[1], [1], [0], [0], [0, 0, 1, 0], [], []>} : vector<64x18xf32>, vector<128x18xf32>, vector<64x128xf32> -> vector<64x128xf32>
    %c0_3 = arith.constant 0 : index
    %c0_4 = arith.constant 0 : index
    %8 = vector.load %arg5[%c0_3, %c0_4] : memref<98x1xf32, #tpu.memory_space<vmem>>, vector<64x1xf32>
    %9 = vector.broadcast %8 : vector<64x1xf32> to vector<64x128xf32>
    %10 = arith.addf %7, %9 : vector<64x128xf32>
    %cst_5 = arith.constant 0.000000e+00 : f32
    %11 = vector.broadcast %cst_5 : f32 to vector<64x128xf32>
    %12 = arith.maximumf %10, %11 : vector<64x128xf32>
    %c0_6 = arith.constant 0 : index
    %c0_7 = arith.constant 0 : index
    %13 = vector.load %arg3[%c0_6, %c0_7] : memref<32x64xf32, #tpu.memory_space<vmem>>, vector<32x64xf32>
    %cst_8 = arith.constant dense<0.000000e+00> : vector<32x128xf32>
    %14 = tpu.matmul %13, %12, %cst_8 {dimension_numbers = #tpu.dot_dimension_numbers<[1], [0], [0], [1], [0, 0, 1, 1], [], []>} : vector<32x64xf32>, vector<64x128xf32>, vector<32x128xf32> -> vector<32x128xf32>
    %c64 = arith.constant 64 : index
    %c0_9 = arith.constant 0 : index
    %15 = vector.load %arg5[%c64, %c0_9] : memref<98x1xf32, #tpu.memory_space<vmem>>, vector<32x1xf32>
    %16 = vector.broadcast %15 : vector<32x1xf32> to vector<32x128xf32>
    %17 = arith.addf %14, %16 : vector<32x128xf32>
    %cst_10 = arith.constant 0.000000e+00 : f32
    %18 = vector.broadcast %cst_10 : f32 to vector<32x128xf32>
    %19 = arith.maximumf %17, %18 : vector<32x128xf32>
    %c0_11 = arith.constant 0 : index
    %c0_12 = arith.constant 0 : index
    %20 = vector.load %arg4[%c0_11, %c0_12] : memref<2x32xf32, #tpu.memory_space<vmem>>, vector<2x32xf32>
    %cst_13 = arith.constant dense<0.000000e+00> : vector<2x128xf32>
    %21 = tpu.matmul %20, %19, %cst_13 {dimension_numbers = #tpu.dot_dimension_numbers<[1], [0], [0], [1], [0, 0, 1, 1], [], []>} : vector<2x32xf32>, vector<32x128xf32>, vector<2x128xf32> -> vector<2x128xf32>
    %c96 = arith.constant 96 : index
    %c0_14 = arith.constant 0 : index
    %22 = vector.load %arg5[%c96, %c0_14] : memref<98x1xf32, #tpu.memory_space<vmem>>, vector<2x1xf32>
    %23 = vector.broadcast %22 : vector<2x1xf32> to vector<2x128xf32>
    %24 = arith.addf %21, %23 : vector<2x128xf32>
    %25 = tpu.iota {dimensions = array<i32: 0>} : vector<2x128xi32>
    %c0_i32_15 = arith.constant 0 : i32
    %26 = vector.broadcast %c0_i32_15 : i32 to vector<2x128xi32>
    %27 = arith.cmpi eq, %25, %26 : vector<2x128xi32>
    %28 = math.tanh %24 : vector<2x128xf32>
    %29 = arith.select %27, %28, %24 : vector<2x128xi1>, vector<2x128xf32>
    %c0_16 = arith.constant 0 : index
    %30 = arith.index_cast %3 : i32 to index
    %31 = vector.load %arg6[%c0_16, %30] : memref<2x128xf32, #tpu.memory_space<vmem>>, vector<2x128xf32>
    tpu.vector_store %arg6[%c0_16, %30], %29 {strides = array<i32>} : memref<2x128xf32, #tpu.memory_space<vmem>>, vector<2x128xf32>,
    %c1_i32_17 = arith.constant 1 : i32
    return
  }
  func.func @transform_0(%arg0: i32) -> (i32, i32) {
    %c0_i32 = arith.constant 0 : i32
    %c0_i32_0 = arith.constant 0 : i32
    return %arg0, %c0_i32 : i32, i32
  }
  func.func @transform_1(%arg0: i32) -> (i32, i32) {
    %c0_i32 = arith.constant 0 : i32
    %c0_i32_0 = arith.constant 0 : i32
    %c0_i32_1 = arith.constant 0 : i32
    return %c0_i32, %c0_i32_0 : i32, i32
  }
  func.func @transform_2(%arg0: i32) -> (i32, i32) {
    %c0_i32 = arith.constant 0 : i32
    %c0_i32_0 = arith.constant 0 : i32
    %c0_i32_1 = arith.constant 0 : i32
    return %c0_i32, %c0_i32_0 : i32, i32
  }
  func.func @transform_3(%arg0: i32) -> (i32, i32) {
    %c0_i32 = arith.constant 0 : i32
    %c0_i32_0 = arith.constant 0 : i32
    %c0_i32_1 = arith.constant 0 : i32
    return %c0_i32, %c0_i32_0 : i32, i32
  }
  func.func @transform_4(%arg0: i32) -> (i32, i32) {
    %c0_i32 = arith.constant 0 : i32
    %c0_i32_0 = arith.constant 0 : i32
    %c0_i32_1 = arith.constant 0 : i32
    return %c0_i32, %c0_i32_0 : i32, i32
  }
  func.func @transform_5(%arg0: i32) -> (i32, i32) {
    %c0_i32 = arith.constant 0 : i32
    %c0_i32_0 = arith.constant 0 : i32
    return %c0_i32, %arg0 : i32, i32
  }
}

</mosaic_0001>

<llo_original>
// kernel: trading_model_dual_forward.1
$region0: #{trading_model_dual_forward.1}
  #allocation0 [shape = 'u32[]', space=smem, size = 0x4, offset = 0x4, fixed_abs, tag = 'smem constant byte address 0x4 - core index']
  #allocation1 [shape = 'u32[144,128]{1,0:T(1,128)}', space=vmem, size = 0x12000, scoped, tag = 'internal scratch']
  %s0 = inlined_call_operand.vmem [shape: f32[8,18], index: 0, kind: input, shape index: {}]
  %s1 = inlined_call_operand.vmem [shape: f32[64,18], index: 1, kind: input, shape index: {}]
  %s2 = inlined_call_operand.vmem [shape: f32[32,64], index: 2, kind: input, shape index: {}]
  %s3 = inlined_call_operand.vmem [shape: f32[2,32], index: 3, kind: input, shape index: {}]
  %s4 = inlined_call_operand.vmem [shape: f32[98,1], index: 4, kind: input, shape index: {}]
  %s5 = inlined_call_operand.vmem [shape: f32[2,128], index: 5, kind: output, shape index: {}]
  %s6 = sld [smem:[#allocation0]]
  $region30: #{trading_model_dual_forward.1} parent=0
    _
  %s8 = ssub.s32 1, %s6
  %s9 = scalar_select 0, %s8, %s6
  // Predicated region
  $region2: #{trading_model_dual_forward.1} parent=0 // pred_check
    _
  $region3: #{trading_model_dual_forward.1} parent=0 // pred_check_branch
    %11 = sbr.rel (0) target = $region5
  $region4: #{trading_model_dual_forward.1} parent=0 // pred_region
    _
  $region5: #{trading_model_dual_forward.1} parent=0 // pred_fallthru
    _
  // Predicated region
  $region6: #{trading_model_dual_forward.1} parent=0 // pred_check
    _
  $region7: #{trading_model_dual_forward.1} parent=0 // pred_check_branch
    %13 = sbr.rel (0) target = $region9
  $region8: #{trading_model_dual_forward.1} parent=0 // pred_region
    _
  $region9: #{trading_model_dual_forward.1} parent=0 // pred_fallthru
    _
  // Predicated region
  $region10: #{trading_model_dual_forward.1} parent=0 // pred_check
    _
  $region11: #{trading_model_dual_forward.1} parent=0 // pred_check_branch
    %15 = sbr.rel (0) target = $region13
  $region12: #{trading_model_dual_forward.1} parent=0 // pred_region
    _
  $region13: #{trading_model_dual_forward.1} parent=0 // pred_fallthru
    _
  // Predicated region
  $region14: #{trading_model_dual_forward.1} parent=0 // pred_check
    _
  $region15: #{trading_model_dual_forward.1} parent=0 // pred_check_branch
    %17 = sbr.rel (0) target = $region17
  $region16: #{trading_model_dual_forward.1} parent=0 // pred_region
    _
  $region17: #{trading_model_dual_forward.1} parent=0 // pred_fallthru
    _
  // Predicated region
  $region18: #{trading_model_dual_forward.1} parent=0 // pred_check
    _
  $region19: #{trading_model_dual_forward.1} parent=0 // pred_check_branch
    %19 = sbr.rel (0) target = $region21
  $region20: #{trading_model_dual_forward.1} parent=0 // pred_region
    _
  $region21: #{trading_model_dual_forward.1} parent=0 // pred_fallthru
    _
  %v20 = vld [vmem:[%s0] sm:$0xff]
  %v21 = vld [vmem:[%s0 + $0x8] sm:$0xff]
  %v22 = vld [vmem:[%s0 + $0x10] sm:$0xff]
  %v23 = vld [vmem:[%s0 + $0x18] sm:$0xff]
  %v24 = vld [vmem:[%s0 + $0x20] sm:$0xff]
  %v25 = vld [vmem:[%s0 + $0x28] sm:$0xff]
  %v26 = vld [vmem:[%s0 + $0x30] sm:$0xff]
  %v27 = vld [vmem:[%s0 + $0x38] sm:$0xff]
  %v28 = vld [vmem:[%s0 + $0x40] sm:$0xff]
  %v29 = vld [vmem:[%s0 + $0x48] sm:$0xff]
  %v30 = vld [vmem:[%s0 + $0x50] sm:$0xff]
  %v31 = vld [vmem:[%s0 + $0x58] sm:$0xff]
  %v32 = vld [vmem:[%s0 + $0x60] sm:$0xff]
  %v33 = vld [vmem:[%s0 + $0x68] sm:$0xff]
  %v34 = vld [vmem:[%s0 + $0x70] sm:$0xff]
  %v35 = vld [vmem:[%s0 + $0x78] sm:$0xff]
  %v36 = vld [vmem:[%s1] sm:$0xff]
  %v37 = vld [vmem:[%s1 + $0x8] sm:$0xff]
  %v38 = vld [vmem:[%s1 + $0x10] sm:$0xff]
  %v39 = vld [vmem:[%s1 + $0x18] sm:$0xff]
  %v40 = vld [vmem:[%s1 + $0x20] sm:$0xff]
  %v41 = vld [vmem:[%s1 + $0x28] sm:$0xff]
  %v42 = vld [vmem:[%s1 + $0x30] sm:$0xff]
  %v43 = vld [vmem:[%s1 + $0x38] sm:$0xff]
  %v44 = vld [vmem:[%s4] sm:$0xff]
  %v45 = vld [vmem:[%s4 + $0x8] sm:$0xff]
  %v46 = vld [vmem:[%s4 + $0x10] sm:$0xff]
  %v47 = vld [vmem:[%s4 + $0x18] sm:$0xff]
  %v48 = vld [vmem:[%s4 + $0x20] sm:$0xff]
  %v49 = vld [vmem:[%s4 + $0x28] sm:$0xff]
  %v50 = vld [vmem:[%s4 + $0x30] sm:$0xff]
  %v51 = vld [vmem:[%s4 + $0x38] sm:$0xff]
  %53 = vset.pattern.permute.xlu0 0
  %54 = vperm.xlu0 %53, %v44
  %v55 = vpop.permute.xlu0 %54
  %58 = vset.pattern.permute.xlu0 0
  %59 = vperm.xlu0 %58, %v45
  %v60 = vpop.permute.xlu0 %59
  %63 = vset.pattern.permute.xlu0 0
  %64 = vperm.xlu0 %63, %v46
  %v65 = vpop.permute.xlu0 %64
  %68 = vset.pattern.permute.xlu0 0
  %69 = vperm.xlu0 %68, %v47
  %v70 = vpop.permute.xlu0 %69
  %73 = vset.pattern.permute.xlu0 0
  %74 = vperm.xlu0 %73, %v48
  %v75 = vpop.permute.xlu0 %74
  %78 = vset.pattern.permute.xlu0 0
  %79 = vperm.xlu0 %78, %v49
  %v80 = vpop.permute.xlu0 %79
  %83 = vset.pattern.permute.xlu0 0
  %84 = vperm.xlu0 %83, %v50
  %v85 = vpop.permute.xlu0 %84
  %88 = vset.pattern.permute.xlu0 0
  %89 = vperm.xlu0 %88, %v51
  %v90 = vpop.permute.xlu0 %89
  %vm92 = vcmask 146432
  %v94 = vsel %vm92, %v36, 0
  %v97 = vsel %vm92, %v37, 0
  %v100 = vsel %vm92, %v38, 0
  %v103 = vsel %vm92, %v39, 0
  %v106 = vsel %vm92, %v40, 0
  %v109 = vsel %vm92, %v41, 0
  %v112 = vsel %vm92, %v42, 0
  %v115 = vsel %vm92, %v43, 0
  %v118 = vsel %vm92, %v20, 0
  %v121 = vsel %vm92, %v21, 0
  %v124 = vsel %vm92, %v22, 0
  %v127 = vsel %vm92, %v23, 0
  %v130 = vsel %vm92, %v24, 0
  %v133 = vsel %vm92, %v25, 0
  %v136 = vsel %vm92, %v26, 0
  %v139 = vsel %vm92, %v27, 0
  %v142 = vsel %vm92, %v28, 0
  %v145 = vsel %vm92, %v29, 0
  %v148 = vsel %vm92, %v30, 0
  %v151 = vsel %vm92, %v31, 0
  %v154 = vsel %vm92, %v32, 0
  %v157 = vsel %vm92, %v33, 0
  %v160 = vsel %vm92, %v34, 0
  %v163 = vsel %vm92, %v35, 0
  %165 = vmatprep.subr.mxu0 0.0
  %166 = vmatpush1.xpose.msra.mxu0 %v118
  %167 = vmatprep.subr.mxu0 0.0
  %168 = vmatpush1.xpose.msra.mxu0 %v121
  %169 = vmatprep.subr.mxu0 0.0
  %170 = vmatpush1.xpose.msra.mxu0 %v124
  %171 = vmatprep.subr.mxu0 0.0
  %172 = vmatpush1.xpose.msra.mxu0 %v127
  %173 = vmatprep.subr.mxu0 0.0
  %174 = vmatpush1.xpose.msra.mxu0 %v130
  %175 = vmatprep.subr.mxu0 0.0
  %176 = vmatpush1.xpose.msra.mxu0 %v133
  %177 = vmatprep.subr.mxu0 0.0
  %178 = vmatpush1.xpose.msra.mxu0 %v136
  %179 = vmatprep.subr.mxu0 0.0
  %180 = vmatpush1.xpose.msra.mxu0 %v139
  %181 = vmatprep.subr.mxu0 0.0
  %182 = vmatpush1.xpose.msra.mxu0 %v142
  %183 = vmatprep.subr.mxu0 0.0
  %184 = vmatpush1.xpose.msra.mxu0 %v145
  %185 = vmatprep.subr.mxu0 0.0
  %186 = vmatpush1.xpose.msra.mxu0 %v148
  %187 = vmatprep.subr.mxu0 0.0
  %188 = vmatpush1.xpose.msra.mxu0 %v151
  %189 = vmatprep.subr.mxu0 0.0
  %190 = vmatpush1.xpose.msra.mxu0 %v154
  %191 = vmatprep.subr.mxu0 0.0
  %192 = vmatpush1.xpose.msra.mxu0 %v157
  %193 = vmatprep.subr.mxu0 0.0
  %194 = vmatpush1.xpose.msra.mxu0 %v160
  %195 = vmatprep.subr.mxu0 0.0
  %196 = vmatpush1.xpose.msra.mxu0 %v163
  %197 = vmatprep.subr.mxu0 0.0
  %198 = vmatpush1.xpose.msra.mxu0 0.0
  %199 = vmatprep.subr.mxu0 0.0
  %200 = vmatpush1.xpose.msra.mxu0 0.0
  %201 = vmatprep.subr.mxu0 0.0
  %202 = vmatpush1.xpose.msra.mxu0 0.0
  %203 = vmatprep.subr.mxu0 0.0
  %204 = vmatpush1.xpose.msra.mxu0 0.0
  %205 = vmatprep.subr.mxu0 0.0
  %206 = vmatpush1.xpose.msra.mxu0 0.0
  %207 = vmatprep.subr.mxu0 0.0
  %208 = vmatpush1.xpose.msra.mxu0 0.0
  %209 = vmatprep.subr.mxu0 0.0
  %210 = vmatpush1.xpose.msra.mxu0 0.0
  %211 = vmatprep.subr.mxu0 0.0
  %212 = vmatpush1.xpose.msra.mxu0 0.0
  %213 = vmatprep.subr.mxu0 0.0
  %214 = vmatpush1.xpose.msra.mxu0 0.0
  %215 = vmatprep.subr.mxu0 0.0
  %216 = vmatpush1.xpose.msra.mxu0 0.0
  %217 = vmatprep.subr.mxu0 0.0
  %218 = vmatpush1.xpose.msra.mxu0 0.0
  %219 = vmatprep.subr.mxu0 0.0
  %220 = vmatpush1.xpose.msra.mxu0 0.0
  %221 = vmatprep.subr.mxu0 0.0
  %222 = vmatpush1.xpose.msra.mxu0 0.0
  %223 = vmatprep.subr.mxu0 0.0
  %224 = vmatpush1.xpose.msra.mxu0 0.0
  %225 = vmatprep.subr.mxu0 0.0
  %226 = vmatpush1.xpose.msra.mxu0 0.0
  %227 = vmatprep.subr.mxu0 0.0
  %228 = vmatpush1.xpose.msra.mxu0 0.0
  %229 = vmatprep.mubr.f32.mxu0 0.0
  %230 = vmatmul.mubr.f32.gmra.mrb[0].mxu0 %v94
  %v231 = vpop.f32.mrb[0].mxu0
  %v232 = vadd.f32 %v55, %v231
  %v233 = vpop.f32.mrb[0].mxu0
  %234 = vmatprep.mubr.f32.mxu0 0.0
  %235 = vmatmul.mubr.f32.gmra.mrb[0].mxu0 %v97
  %v236 = vpop.f32.mrb[0].mxu0
  %v237 = vadd.f32 %v60, %v236
  %v238 = vpop.f32.mrb[0].mxu0
  %239 = vmatprep.mubr.f32.mxu0 0.0
  %240 = vmatmul.mubr.f32.gmra.mrb[0].mxu0 %v100
  %v241 = vpop.f32.mrb[0].mxu0
  %v242 = vadd.f32 %v65, %v241
  %v243 = vpop.f32.mrb[0].mxu0
  %244 = vmatprep.mubr.f32.mxu0 0.0
  %245 = vmatmul.mubr.f32.gmra.mrb[0].mxu0 %v103
  %v246 = vpop.f32.mrb[0].mxu0
  %v247 = vadd.f32 %v70, %v246
  %v248 = vpop.f32.mrb[0].mxu0
  %249 = vmatprep.mubr.f32.mxu0 0.0
  %250 = vmatmul.mubr.f32.gmra.mrb[0].mxu0 %v106
  %v251 = vpop.f32.mrb[0].mxu0
  %v252 = vadd.f32 %v75, %v251
  %v253 = vpop.f32.mrb[0].mxu0
  %254 = vmatprep.mubr.f32.mxu0 0.0
  %255 = vmatmul.mubr.f32.gmra.mrb[0].mxu0 %v109
  %v256 = vpop.f32.mrb[0].mxu0
  %v257 = vadd.f32 %v80, %v256
  %v258 = vpop.f32.mrb[0].mxu0
  %259 = vmatprep.mubr.f32.mxu0 0.0
  %260 = vmatmul.mubr.f32.gmra.mrb[0].mxu0 %v112
  %v261 = vpop.f32.mrb[0].mxu0
  %v262 = vadd.f32 %v85, %v261
  %v263 = vpop.f32.mrb[0].mxu0
  %264 = vmatprep.mubr.f32.mxu0 0.0
  %265 = vmatmul.mubr.f32.gmra.mrb[0].mxu0 %v115
  %v266 = vpop.f32.mrb[0].mxu0
  %v267 = vadd.f32 %v90, %v266
  %v268 = vpop.f32.mrb[0].mxu0
  %269 = vdwg.mxu0
  %v270 = vmax.f32 %v232, 0.0
  %v271 = vmax.f32 %v237, 0.0
  %v272 = vmax.f32 %v242, 0.0
  %v273 = vmax.f32 %v247, 0.0
  %v274 = vmax.f32 %v252, 0.0
  %v275 = vmax.f32 %v257, 0.0
  %v276 = vmax.f32 %v262, 0.0
  %v277 = vmax.f32 %v267, 0.0
  %v278 = vld [vmem:[%s2] sm:$0xff]
  %v279 = vld [vmem:[%s2 + $0x8] sm:$0xff]
  %v280 = vld [vmem:[%s2 + $0x10] sm:$0xff]
  %v281 = vld [vmem:[%s2 + $0x18] sm:$0xff]
  %v282 = vld [vmem:[%s4 + $0x40] sm:$0xff]
  %v283 = vld [vmem:[%s4 + $0x48] sm:$0xff]
  %v284 = vld [vmem:[%s4 + $0x50] sm:$0xff]
  %v285 = vld [vmem:[%s4 + $0x58] sm:$0xff]
  %287 = vset.pattern.permute.xlu0 0
  %288 = vperm.xlu0 %287, %v282
  %v289 = vpop.permute.xlu0 %288
  %292 = vset.pattern.permute.xlu0 0
  %293 = vperm.xlu0 %292, %v283
  %v294 = vpop.permute.xlu0 %293
  %297 = vset.pattern.permute.xlu0 0
  %298 = vperm.xlu0 %297, %v284
  %v299 = vpop.permute.xlu0 %298
  %302 = vset.pattern.permute.xlu0 0
  %303 = vperm.xlu0 %302, %v285
  %v304 = vpop.permute.xlu0 %303
  %vm306 = vcmask 523264
  %v308 = vsel %vm306, %v278, 0
  %v311 = vsel %vm306, %v279, 0
  %v314 = vsel %vm306, %v280, 0
  %v317 = vsel %vm306, %v281, 0
  %319 = vmatprep.subr.mxu0 0.0
  %320 = vmatpush1.msra.mxu0 %v270
  %321 = vmatprep.subr.mxu0 0.0
  %322 = vmatpush1.msra.mxu0 %v271
  %323 = vmatprep.subr.mxu0 0.0
  %324 = vmatpush1.msra.mxu0 %v272
  %325 = vmatprep.subr.mxu0 0.0
  %326 = vmatpush1.msra.mxu0 %v273
  %327 = vmatprep.subr.mxu0 0.0
  %328 = vmatpush1.msra.mxu0 %v274
  %329 = vmatprep.subr.mxu0 0.0
  %330 = vmatpush1.msra.mxu0 %v275
  %331 = vmatprep.subr.mxu0 0.0
  %332 = vmatpush1.msra.mxu0 %v276
  %333 = vmatprep.subr.mxu0 0.0
  %334 = vmatpush1.msra.mxu0 %v277
  %335 = vmatprep.subr.mxu0 0.0
  %336 = vmatpush1.msra.mxu0 0.0
  %337 = vmatprep.subr.mxu0 0.0
  %338 = vmatpush1.msra.mxu0 0.0
  %339 = vmatprep.subr.mxu0 0.0
  %340 = vmatpush1.msra.mxu0 0.0
  %341 = vmatprep.subr.mxu0 0.0
  %342 = vmatpush1.msra.mxu0 0.0
  %343 = vmatprep.subr.mxu0 0.0
  %344 = vmatpush1.msra.mxu0 0.0
  %345 = vmatprep.subr.mxu0 0.0
  %346 = vmatpush1.msra.mxu0 0.0
  %347 = vmatprep.subr.mxu0 0.0
  %348 = vmatpush1.msra.mxu0 0.0
  %349 = vmatprep.subr.mxu0 0.0
  %350 = vmatpush1.msra.mxu0 0.0
  %351 = vmatprep.subr.mxu0 0.0
  %352 = vmatpush1.msra.mxu0 0.0
  %353 = vmatprep.subr.mxu0 0.0
  %354 = vmatpush1.msra.mxu0 0.0
  %355 = vmatprep.subr.mxu0 0.0
  %356 = vmatpush1.msra.mxu0 0.0
  %357 = vmatprep.subr.mxu0 0.0
  %358 = vmatpush1.msra.mxu0 0.0
  %359 = vmatprep.subr.mxu0 0.0
  %360 = vmatpush1.msra.mxu0 0.0
  %361 = vmatprep.subr.mxu0 0.0
  %362 = vmatpush1.msra.mxu0 0.0
  %363 = vmatprep.subr.mxu0 0.0
  %364 = vmatpush1.msra.mxu0 0.0
  %365 = vmatprep.subr.mxu0 0.0
  %366 = vmatpush1.msra.mxu0 0.0
  %367 = vmatprep.subr.mxu0 0.0
  %368 = vmatpush1.msra.mxu0 0.0
  %369 = vmatprep.subr.mxu0 0.0
  %370 = vmatpush1.msra.mxu0 0.0
  %371 = vmatprep.subr.mxu0 0.0
  %372 = vmatpush1.msra.mxu0 0.0
  %373 = vmatprep.subr.mxu0 0.0
  %374 = vmatpush1.msra.mxu0 0.0
  %375 = vmatprep.subr.mxu0 0.0
  %376 = vmatpush1.msra.mxu0 0.0
  %377 = vmatprep.subr.mxu0 0.0
  %378 = vmatpush1.msra.mxu0 0.0
  %379 = vmatprep.subr.mxu0 0.0
  %380 = vmatpush1.msra.mxu0 0.0
  %381 = vmatprep.subr.mxu0 0.0
  %382 = vmatpush1.msra.mxu0 0.0
  %383 = vmatprep.mubr.f32.mxu0 0.0
  %384 = vmatmul.mubr.f32.gmra.mrb[0].mxu0 %v308
  %v385 = vpop.f32.mrb[0].mxu0
  %v386 = vadd.f32 %v289, %v385
  %v387 = vpop.f32.mrb[0].mxu0
  %388 = vmatprep.mubr.f32.mxu0 0.0
  %389 = vmatmul.mubr.f32.gmra.mrb[0].mxu0 %v311
  %v390 = vpop.f32.mrb[0].mxu0
  %v391 = vadd.f32 %v294, %v390
  %v392 = vpop.f32.mrb[0].mxu0
  %393 = vmatprep.mubr.f32.mxu0 0.0
  %394 = vmatmul.mubr.f32.gmra.mrb[0].mxu0 %v314
  %v395 = vpop.f32.mrb[0].mxu0
  %v396 = vadd.f32 %v299, %v395
  %v397 = vpop.f32.mrb[0].mxu0
  %398 = vmatprep.mubr.f32.mxu0 0.0
  %399 = vmatmul.mubr.f32.gmra.mrb[0].mxu0 %v317
  %v400 = vpop.f32.mrb[0].mxu0
  %v401 = vadd.f32 %v304, %v400
  %v402 = vpop.f32.mrb[0].mxu0
  %403 = vdwg.mxu0
  %v404 = vmax.f32 %v386, 0.0
  %v405 = vmax.f32 %v391, 0.0
  %v406 = vmax.f32 %v396, 0.0
  %v407 = vmax.f32 %v401, 0.0
  %v408 = vld [vmem:[%s3] sm:$0x3]
  %v409 = vld [vmem:[%s4 + $0x60] sm:$0x3]
  %411 = vset.pattern.permute.xlu0 0
  %412 = vperm.xlu0 %411, %v409
  %v413 = vpop.permute.xlu0 %412
  %vm415 = vcmask 261120
  %v417 = vsel %vm415, %v408, 0
  %419 = vmatprep.subr.mxu0 0.0
  %420 = vmatpush1.msra.mxu0 %v404
  %421 = vmatprep.subr.mxu0 0.0
  %422 = vmatpush1.msra.mxu0 %v405
  %423 = vmatprep.subr.mxu0 0.0
  %424 = vmatpush1.msra.mxu0 %v406
  %425 = vmatprep.subr.mxu0 0.0
  %426 = vmatpush1.msra.mxu0 %v407
  %427 = vmatprep.subr.mxu0 0.0
  %428 = vmatpush1.msra.mxu0 0.0
  %429 = vmatprep.subr.mxu0 0.0
  %430 = vmatpush1.msra.mxu0 0.0
  %431 = vmatprep.subr.mxu0 0.0
  %432 = vmatpush1.msra.mxu0 0.0
  %433 = vmatprep.subr.mxu0 0.0
  %434 = vmatpush1.msra.mxu0 0.0
  %435 = vmatprep.subr.mxu0 0.0
  %436 = vmatpush1.msra.mxu0 0.0
  %437 = vmatprep.subr.mxu0 0.0
  %438 = vmatpush1.msra.mxu0 0.0
  %439 = vmatprep.subr.mxu0 0.0
  %440 = vmatpush1.msra.mxu0 0.0
  %441 = vmatprep.subr.mxu0 0.0
  %442 = vmatpush1.msra.mxu0 0.0
  %443 = vmatprep.subr.mxu0 0.0
  %444 = vmatpush1.msra.mxu0 0.0
  %445 = vmatprep.subr.mxu0 0.0
  %446 = vmatpush1.msra.mxu0 0.0
  %447 = vmatprep.subr.mxu0 0.0
  %448 = vmatpush1.msra.mxu0 0.0
  %449 = vmatprep.subr.mxu0 0.0
  %450 = vmatpush1.msra.mxu0 0.0
  %451 = vmatprep.subr.mxu0 0.0
  %452 = vmatpush1.msra.mxu0 0.0
  %453 = vmatprep.subr.mxu0 0.0
  %454 = vmatpush1.msra.mxu0 0.0
  %455 = vmatprep.subr.mxu0 0.0
  %456 = vmatpush1.msra.mxu0 0.0
  %457 = vmatprep.subr.mxu0 0.0
  %458 = vmatpush1.msra.mxu0 0.0
  %459 = vmatprep.subr.mxu0 0.0
  %460 = vmatpush1.msra.mxu0 0.0
  %461 = vmatprep.subr.mxu0 0.0
  %462 = vmatpush1.msra.mxu0 0.0
  %463 = vmatprep.subr.mxu0 0.0
  %464 = vmatpush1.msra.mxu0 0.0
  %465 = vmatprep.subr.mxu0 0.0
  %466 = vmatpush1.msra.mxu0 0.0
  %467 = vmatprep.subr.mxu0 0.0
  %468 = vmatpush1.msra.mxu0 0.0
  %469 = vmatprep.subr.mxu0 0.0
  %470 = vmatpush1.msra.mxu0 0.0
  %471 = vmatprep.subr.mxu0 0.0
  %472 = vmatpush1.msra.mxu0 0.0
  %473 = vmatprep.subr.mxu0 0.0
  %474 = vmatpush1.msra.mxu0 0.0
  %475 = vmatprep.subr.mxu0 0.0
  %476 = vmatpush1.msra.mxu0 0.0
  %477 = vmatprep.subr.mxu0 0.0
  %478 = vmatpush1.msra.mxu0 0.0
  %479 = vmatprep.subr.mxu0 0.0
  %480 = vmatpush1.msra.mxu0 0.0
  %481 = vmatprep.subr.mxu0 0.0
  %482 = vmatpush1.msra.mxu0 0.0
  %483 = vmatprep.mubr.f32.mxu0 0.0
  %484 = vmatmul.mubr.f32.gmra.mrb[0].mxu0 %v417
  %v485 = vpop.f32.mrb[0].mxu0
  %v486 = vadd.f32 %v413, %v485
  %v487 = vpop.f32.mrb[0].mxu0
  %488 = vdwg.mxu0
  %v489 = vlaneseq
  %v490 = vshrl.u32 %v489, 7
  %vm491 = vcmp.eq.s32.totalorder %v490, 0
  %v492 = vtanh.pop %v486
  %v493 = vsel %vm491, %v492, %v486
  %494 = vst [vmem:[%s5] sm:$0x3] %v493
  // Predicated region
  $region22: #{trading_model_dual_forward.1} parent=0 // pred_check
    _
  $region23: #{trading_model_dual_forward.1} parent=0 // pred_check_branch
    %496 = sbr.rel (0) target = $region25
  $region24: #{trading_model_dual_forward.1} parent=0 // pred_region
    _
  $region25: #{trading_model_dual_forward.1} parent=0 // pred_fallthru
    _
  // Predicated region
  $region26: #{trading_model_dual_forward.1} parent=0 // pred_check
    _
  $region27: #{trading_model_dual_forward.1} parent=0 // pred_check_branch
    %498 = sbr.rel (0) target = $region29
  $region28: #{trading_model_dual_forward.1} parent=0 // pred_region
    _
  $region29: #{trading_model_dual_forward.1} parent=0 // pred_fallthru
    _

</llo_original>
